<compile_context>
chip_gen: v6e
topology: v6e:2x2x1
jax: 0.10.0
libtpu: 0.0.40
codegen_flags: <defaults>
</compile_context>

<pallas_src>
import functools

import jax
import jax.numpy as jnp
from jax.experimental import pallas as pl
from jax.experimental.pallas import tpu as pltpu


def _actor_kernel(x_ref, w_ref, b_ref, out_ref, *, dims, out_w):
    """One batch tile of the Actor MLP.

    x_ref  : (TM, S)          f32  input activations
    w_ref  : (4, KMAX, NMAX)  bf16 packed, zero-padded weights (one layer per row)
    b_ref  : (4, NMAX)        f32  packed, zero-padded biases
    out_ref: (TM, out_w)      f32  action probabilities (lanes >= n_actions are 0)
    """
    S, fc1, fc2, fc3, n_act = dims

    x = x_ref[...]                                        # (TM, S) f32

    # fc1 + relu  (bf16 MXU operands, f32 accumulation; bias/relu in f32)
    h = jnp.dot(x.astype(jnp.bfloat16), w_ref[0, 0:S, 0:fc1],
                preferred_element_type=jnp.float32)
    h = jnp.maximum(h + b_ref[0:1, 0:fc1], 0.0)

    # fc2 + relu
    h = jnp.dot(h.astype(jnp.bfloat16), w_ref[1, 0:fc1, 0:fc2],
                preferred_element_type=jnp.float32)
    h = jnp.maximum(h + b_ref[1:2, 0:fc2], 0.0)

    # fc3 + relu
    h = jnp.dot(h.astype(jnp.bfloat16), w_ref[2, 0:fc2, 0:fc3],
                preferred_element_type=jnp.float32)
    h = jnp.maximum(h + b_ref[2:3, 0:fc3], 0.0)

    # fc4 + softmax over the action (last) axis
    logits = jnp.dot(h.astype(jnp.bfloat16), w_ref[3, 0:fc3, 0:n_act],
                     preferred_element_type=jnp.float32)
    logits = logits + b_ref[3:4, 0:n_act]

    m = jnp.max(logits, axis=-1, keepdims=True)
    e = jnp.exp(logits - m)
    denom = jnp.sum(e, axis=-1, keepdims=True)
    probs = e / denom                                     # exact divide: rows sum to 1

    if out_w == n_act:
        out_ref[...] = probs.astype(out_ref.dtype)
    else:
        # Lane-dense store: one unmasked vst of a full-width tile.
        pad = jnp.zeros((probs.shape[0], out_w - n_act), probs.dtype)
        out_ref[...] = jnp.concatenate([probs, pad], axis=-1).astype(out_ref.dtype)


def prepare_actor_params(params):
    """One-time packing: bf16 weights -> (4,KMAX,NMAX), f32 biases -> (4,NMAX)."""
    w1, b1 = params["fc1"]
    w2, b2 = params["fc2"]
    w3, b3 = params["fc3"]
    w4, b4 = params["fc4"]

    S, fc1 = w1.shape
    fc2 = w2.shape[1]
    fc3 = w3.shape[1]
    n_act = w4.shape[1]

    kmax = max(S, fc1, fc2, fc3)
    nmax = max(fc1, fc2, fc3, n_act)

    def pad_w(w):
        w = w.astype(jnp.bfloat16)
        return jnp.pad(w, ((0, kmax - w.shape[0]), (0, nmax - w.shape[1])))

    def pad_b(b):
        b = jnp.reshape(b, (-1,)).astype(jnp.float32)
        return jnp.pad(b, (0, nmax - b.shape[0]))

    wbuf = jnp.stack([pad_w(w1), pad_w(w2), pad_w(w3), pad_w(w4)], axis=0)
    bbuf = jnp.stack([pad_b(b1), pad_b(b2), pad_b(b3), pad_b(b4)], axis=0)

    return {
        "w": jax.device_put(wbuf),
        "b": jax.device_put(bbuf),
        "dims": (int(S), int(fc1), int(fc2), int(fc3), int(n_act)),
    }


@functools.partial(jax.jit, static_argnames=("dims",))
def _actor_forward(state, wbuf, bbuf, *, dims):
    S, fc1, fc2, fc3, n_act = dims
    B = state.shape[0]

    # ---- batch tiling (multiple of 8) --------------------------------------
    ceil8 = -(-B // 8) * 8
    if ceil8 <= 256:
        TM = ceil8                       # single grid step; latency regime
    elif ceil8 <= 2048:
        half = -(-ceil8 // 2)            # >= 2 grid steps -> both v7x TCs busy
        TM = -(-half // 8) * 8
    else:
        TM = 1024                        # amortize ~0.35 us/step grid overhead
    padded_B = -(-B // TM) * TM
    grid = (padded_B // TM,)

    # Lane-dense output only in the small-batch latency regime; narrow output
    # for large B where HBM write bandwidth is the binding resource.
    out_w = 128 if (padded_B <= 1024 and n_act < 128) else n_act

    x = state.astype(jnp.float32)
    if padded_B != B:
        x = jnp.pad(x, ((0, padded_B - B), (0, 0)))

    kmax, nmax = int(wbuf.shape[1]), int(wbuf.shape[2])

    flops = 2 * padded_B * (S * fc1 + fc1 * fc2 + fc2 * fc3 + fc3 * n_act)
    bytes_accessed = (padded_B * S * 4 + wbuf.size * 2 + bbuf.size * 4
                      + padded_B * out_w * 4)

    kernel = functools.partial(_actor_kernel, dims=dims, out_w=out_w)

    out = pl.pallas_call(
        kernel,
        out_shape=jax.ShapeDtypeStruct((padded_B, out_w), jnp.float32),
        grid=grid,
        in_specs=[
            pl.BlockSpec((TM, S), lambda i: (i, 0)),              # state tile
            pl.BlockSpec((4, kmax, nmax), lambda i: (0, 0, 0)),   # packed weights (resident)
            pl.BlockSpec((4, nmax), lambda i: (0, 0)),            # packed biases (resident)
        ],
        out_specs=pl.BlockSpec((TM, out_w), lambda i: (i, 0)),
        compiler_params=pltpu.CompilerParams(
            dimension_semantics=("parallel",)),
        cost_estimate=pl.CostEstimate(flops=flops,
                                      transcendentals=padded_B * n_act,
                                      bytes_accessed=bytes_accessed),
    )(x, wbuf, bbuf)

    return out[:B, :n_act]


def actor_forward(state, prepared):
    """state: (B, state_dims);  prepared: output of prepare_actor_params."""
    return _actor_forward(state, prepared["w"], prepared["b"],
                          dims=prepared["dims"])


def init_linear(key, fan_in, fan_out):
    """Deterministic init mimicking nn.Linear (uniform +/- 1/sqrt(fan_in)).
    Weight stored as (in, out) for the kernel's x @ W convention."""
    kw, kb = jax.random.split(key)
    bound = 1.0 / jnp.sqrt(fan_in)
    w = jax.random.uniform(kw, (fan_in, fan_out), jnp.float32, -bound, bound)
    b = jax.random.uniform(kb, (1, fan_out), jnp.float32, -bound, bound)
    return w, b


if __name__ == "__main__":
    # Small shapes consistent with the module's constructor arguments.
    batch = 8
    state_dims = 16
    fc1_dims, fc2_dims, fc3_dims = 64, 64, 32
    n_actions = 8

    key = jax.random.PRNGKey(0)
    k_x, k1, k2, k3, k4 = jax.random.split(key, 5)

    params = {
        "fc1": init_linear(k1, state_dims, fc1_dims),
        "fc2": init_linear(k2, fc1_dims, fc2_dims),
        "fc3": init_linear(k3, fc2_dims, fc3_dims),
        "fc4": init_linear(k4, fc3_dims, n_actions),
    }

    prepared = prepare_actor_params(params)   # one-time pack/cast (not in hot path)
    state = jax.random.normal(k_x, (batch, state_dims), jnp.float32)

    probs = actor_forward(state, prepared)
    jax.block_until_ready(probs)

    # ---- references --------------------------------------------------------
    def ref_f32(x):
        h = jax.nn.relu(x @ params["fc1"][0] + params["fc1"][1])
        h = jax.nn.relu(h @ params["fc2"][0] + params["fc2"][1])
        h = jax.nn.relu(h @ params["fc3"][0] + params["fc3"][1])
        return jax.nn.softmax(h @ params["fc4"][0] + params["fc4"][1], axis=-1)

    def ref_bf16(x):
        def lin(a, w, b):
            return jnp.dot(a.astype(jnp.bfloat16), w.astype(jnp.bfloat16),
                           preferred_element_type=jnp.float32) + b
        h = jax.nn.relu(lin(x, *params["fc1"]))
        h = jax.nn.relu(lin(h, *params["fc2"]))
        h = jax.nn.relu(lin(h, *params["fc3"]))
        return jax.nn.softmax(lin(h, *params["fc4"]), axis=-1)

    expected_f32 = ref_f32(state)
    expected_bf16 = ref_bf16(state)

    assert probs.shape == (batch, n_actions)
    # bf16-matched reference: tight tolerance
    assert jnp.allclose(probs, expected_bf16, atol=1e-3, rtol=1e-3), (
        jnp.max(jnp.abs(probs - expected_bf16)))
    # full-f32 reference: loose tolerance (bf16 operand rounding)
    assert jnp.allclose(probs, expected_f32, atol=1e-2, rtol=1e-2), (
        jnp.max(jnp.abs(probs - expected_f32)))
    # exact divide -> rows sum to 1 to f32 precision
    assert jnp.allclose(jnp.sum(probs, axis=-1), 1.0, atol=1e-4)

    print("KERNEL_OK")
</pallas_src>

<mosaic_0001>
module attributes {stable_mosaic.version = 11 : i64} {
  func.func @_actor_kernel(%arg0: i32, %arg1: memref<8x16xf32, #tpu.memory_space<vmem>>, %arg2: memref<4x64x64xbf16, #tpu.memory_space<vmem>>, %arg3: memref<4x64xf32, #tpu.memory_space<vmem>>, %arg4: memref<8x128xf32, #tpu.memory_space<vmem>>) attributes {dimension_semantics = [#tpu.dimension_semantics<parallel>], iteration_bounds = array<i64: 1>, scalar_prefetch = 0 : i64, scratch_operands = 0 : i64, tpu.core_type = #tpu.core_type<tc>, window_params = [{transform_indices = @transform_0, window_bounds = array<i64: 8, 16>}, {pipeline_mode = #tpu.pipeline_mode<synchronous>, transform_indices = @transform_1, window_bounds = array<i64: 4, 64, 64>}, {pipeline_mode = #tpu.pipeline_mode<synchronous>, transform_indices = @transform_2, window_bounds = array<i64: 4, 64>}, {transform_indices = @transform_3, window_bounds = array<i64: 8, 128>}]} {
    %c0 = arith.constant 0 : index
    %c0_0 = arith.constant 0 : index
    %0 = vector.load %arg1[%c0, %c0_0] : memref<8x16xf32, #tpu.memory_space<vmem>>, vector<8x16xf32>
    %1 = arith.truncf %0 : vector<8x16xf32> to vector<8x16xbf16>
    %c0_1 = arith.constant 0 : index
    %c0_2 = arith.constant 0 : index
    %c0_3 = arith.constant 0 : index
    %2 = vector.load %arg2[%c0_1, %c0_2, %c0_3] : memref<4x64x64xbf16, #tpu.memory_space<vmem>>, vector<1x16x64xbf16>
    %3 = vector.shape_cast %2 : vector<1x16x64xbf16> to vector<16x64xbf16>
    %cst = arith.constant dense<0.000000e+00> : vector<8x64xf32>
    %4 = tpu.matmul %1, %3, %cst {dimension_numbers = #tpu.dot_dimension_numbers<[1], [0], [0], [1], [0, 0, 1, 1], [], []>} : vector<8x16xbf16>, vector<16x64xbf16>, vector<8x64xf32> -> vector<8x64xf32>
    %c0_4 = arith.constant 0 : index
    %c0_5 = arith.constant 0 : index
    %5 = vector.load %arg3[%c0_4, %c0_5] : memref<4x64xf32, #tpu.memory_space<vmem>>, vector<1x64xf32>
    %6 = vector.broadcast %5 : vector<1x64xf32> to vector<8x64xf32>
    %7 = arith.addf %4, %6 : vector<8x64xf32>
    %cst_6 = arith.constant 0.000000e+00 : f32
    %8 = vector.broadcast %cst_6 : f32 to vector<8x64xf32>
    %9 = arith.maximumf %7, %8 : vector<8x64xf32>
    %10 = arith.truncf %9 : vector<8x64xf32> to vector<8x64xbf16>
    %c1 = arith.constant 1 : index
    %c0_7 = arith.constant 0 : index
    %c0_8 = arith.constant 0 : index
    %11 = vector.load %arg2[%c1, %c0_7, %c0_8] : memref<4x64x64xbf16, #tpu.memory_space<vmem>>, vector<1x64x64xbf16>
    %12 = vector.shape_cast %11 : vector<1x64x64xbf16> to vector<64x64xbf16>
    %cst_9 = arith.constant dense<0.000000e+00> : vector<8x64xf32>
    %13 = tpu.matmul %10, %12, %cst_9 {dimension_numbers = #tpu.dot_dimension_numbers<[1], [0], [0], [1], [0, 0, 1, 1], [], []>} : vector<8x64xbf16>, vector<64x64xbf16>, vector<8x64xf32> -> vector<8x64xf32>
    %c1_10 = arith.constant 1 : index
    %c0_11 = arith.constant 0 : index
    %14 = vector.load %arg3[%c1_10, %c0_11] : memref<4x64xf32, #tpu.memory_space<vmem>>, vector<1x64xf32>
    %15 = vector.broadcast %14 : vector<1x64xf32> to vector<8x64xf32>
    %16 = arith.addf %13, %15 : vector<8x64xf32>
    %cst_12 = arith.constant 0.000000e+00 : f32
    %17 = vector.broadcast %cst_12 : f32 to vector<8x64xf32>
    %18 = arith.maximumf %16, %17 : vector<8x64xf32>
    %19 = arith.truncf %18 : vector<8x64xf32> to vector<8x64xbf16>
    %c2 = arith.constant 2 : index
    %c0_13 = arith.constant 0 : index
    %c0_14 = arith.constant 0 : index
    %20 = vector.load %arg2[%c2, %c0_13, %c0_14] : memref<4x64x64xbf16, #tpu.memory_space<vmem>>, vector<1x64x32xbf16>
    %21 = vector.shape_cast %20 : vector<1x64x32xbf16> to vector<64x32xbf16>
    %cst_15 = arith.constant dense<0.000000e+00> : vector<8x32xf32>
    %22 = tpu.matmul %19, %21, %cst_15 {dimension_numbers = #tpu.dot_dimension_numbers<[1], [0], [0], [1], [0, 0, 1, 1], [], []>} : vector<8x64xbf16>, vector<64x32xbf16>, vector<8x32xf32> -> vector<8x32xf32>
    %c2_16 = arith.constant 2 : index
    %c0_17 = arith.constant 0 : index
    %23 = vector.load %arg3[%c2_16, %c0_17] : memref<4x64xf32, #tpu.memory_space<vmem>>, vector<1x32xf32>
    %24 = vector.broadcast %23 : vector<1x32xf32> to vector<8x32xf32>
    %25 = arith.addf %22, %24 : vector<8x32xf32>
    %cst_18 = arith.constant 0.000000e+00 : f32
    %26 = vector.broadcast %cst_18 : f32 to vector<8x32xf32>
    %27 = arith.maximumf %25, %26 : vector<8x32xf32>
    %28 = arith.truncf %27 : vector<8x32xf32> to vector<8x32xbf16>
    %c3 = arith.constant 3 : index
    %c0_19 = arith.constant 0 : index
    %c0_20 = arith.constant 0 : index
    %29 = vector.load %arg2[%c3, %c0_19, %c0_20] : memref<4x64x64xbf16, #tpu.memory_space<vmem>>, vector<1x32x8xbf16>
    %30 = vector.shape_cast %29 : vector<1x32x8xbf16> to vector<32x8xbf16>
    %cst_21 = arith.constant dense<0.000000e+00> : vector<8x8xf32>
    %31 = tpu.matmul %28, %30, %cst_21 {dimension_numbers = #tpu.dot_dimension_numbers<[1], [0], [0], [1], [0, 0, 1, 1], [], []>} : vector<8x32xbf16>, vector<32x8xbf16>, vector<8x8xf32> -> vector<8x8xf32>
    %c3_22 = arith.constant 3 : index
    %c0_23 = arith.constant 0 : index
    %32 = vector.load %arg3[%c3_22, %c0_23] : memref<4x64xf32, #tpu.memory_space<vmem>>, vector<1x8xf32>
    %33 = vector.broadcast %32 : vector<1x8xf32> to vector<8x8xf32>
    %34 = arith.addf %31, %33 : vector<8x8xf32>
    %cst_24 = arith.constant dense<0xFF800000> : vector<8xf32>
    %35 = vector.multi_reduction <maximumf>, %34, %cst_24 [1] : vector<8x8xf32> to vector<8xf32>
    %36 = vector.shape_cast %35 : vector<8xf32> to vector<8x1xf32>
    %37 = vector.broadcast %36 : vector<8x1xf32> to vector<8x8xf32>
    %38 = arith.subf %34, %37 : vector<8x8xf32>
    %39 = math.exp %38 : vector<8x8xf32>
    %cst_25 = arith.constant dense<0.000000e+00> : vector<8xf32>
    %40 = vector.multi_reduction <add>, %39, %cst_25 [1] : vector<8x8xf32> to vector<8xf32>
    %41 = vector.shape_cast %40 : vector<8xf32> to vector<8x1xf32>
    %42 = vector.broadcast %41 : vector<8x1xf32> to vector<8x8xf32>
    %43 = arith.divf %39, %42 : vector<8x8xf32>
    %cst_26 = arith.constant 0.000000e+00 : f32
    %44 = vector.broadcast %cst_26 : f32 to vector<8x120xf32>
    %45 = tpu.concatenate %43, %44 in 1 : vector<8x8xf32>, vector<8x120xf32> -> vector<8x128xf32>
    %c0_27 = arith.constant 0 : index
    %c0_28 = arith.constant 0 : index
    %46 = vector.load %arg4[%c0_27, %c0_28] : memref<8x128xf32, #tpu.memory_space<vmem>>, vector<8x128xf32>
    tpu.vector_store %arg4[%c0_27, %c0_28], %45 {strides = array<i32>} : memref<8x128xf32, #tpu.memory_space<vmem>>, vector<8x128xf32>,
    return
  }
  func.func @transform_0(%arg0: i32) -> (i32, i32) {
    %c0_i32 = arith.constant 0 : i32
    %c0_i32_0 = arith.constant 0 : i32
    return %arg0, %c0_i32 : i32, i32
  }
  func.func @transform_1(%arg0: i32) -> (i32, i32, i32) {
    %c0_i32 = arith.constant 0 : i32
    %c0_i32_0 = arith.constant 0 : i32
    %c0_i32_1 = arith.constant 0 : i32
    %c0_i32_2 = arith.constant 0 : i32
    return %c0_i32, %c0_i32_0, %c0_i32_1 : i32, i32, i32
  }
  func.func @transform_2(%arg0: i32) -> (i32, i32) {
    %c0_i32 = arith.constant 0 : i32
    %c0_i32_0 = arith.constant 0 : i32
    %c0_i32_1 = arith.constant 0 : i32
    return %c0_i32, %c0_i32_0 : i32, i32
  }
  func.func @transform_3(%arg0: i32) -> (i32, i32) {
    %c0_i32 = arith.constant 0 : i32
    %c0_i32_0 = arith.constant 0 : i32
    return %arg0, %c0_i32 : i32, i32
  }
}

</mosaic_0001>

<llo_original>
// kernel: _actor_forward.1
$region0: #{_actor_forward.1}
  #allocation0 [shape = 'u32[]', space=smem, size = 0x4, offset = 0x4, fixed_abs, tag = 'smem constant byte address 0x4 - core index']
  #allocation1 [shape = 'u32[144,128]{1,0:T(1,128)}', space=vmem, size = 0x12000, scoped, tag = 'internal scratch']
  %s0 = inlined_call_operand.hbm [shape: f32[8,16], index: 0, kind: input, shape index: {}]
  %s1 = inlined_call_operand.hbm [shape: bf16[4,64,64], index: 1, kind: input, shape index: {}]
  %s2 = inlined_call_operand.hbm [shape: f32[4,64], index: 2, kind: input, shape index: {}]
  %s3 = inlined_call_operand.hbm [shape: f32[8,128], index: 3, kind: output, shape index: {}]
  %s4 = sld [smem:[#allocation0]]
  $region34: #{_actor_forward.1} parent=0
    _
  %s6 = ssub.s32 1, %s4
  %s7 = scalar_select 0, %s6, %s4
  $region1: #{_actor_forward.1} parent=0
    #allocation2 [shape = 'u8[4096]{0}', space=vmem, size = 0x1000, scoped, tag = 'input window, operand 0, single buffered']
    #allocation3 [shape = 's32[1]{0}', space=sflag, size = 0x4, scoped, tag = 'scoped memory for _actor_forward.1']
    #allocation4 [shape = 's32[1]{0}', space=sflag, size = 0x4, scoped, tag = 'scoped memory for _actor_forward.1']
    #allocation5 [shape = 'u8[65536]{0}', space=vmem, size = 0x10000, scoped, tag = 'input window, operand 1, single buffered']
    #allocation6 [shape = 's32[1]{0}', space=sflag, size = 0x4, scoped, tag = 'scoped memory for _actor_forward.1']
    #allocation7 [shape = 'u8[2048]{0}', space=vmem, size = 0x800, scoped, tag = 'input window, operand 2, single buffered']
    #allocation8 [shape = 'u8[4096]{0}', space=vmem, size = 0x1000, scoped, tag = 'output window, operand 0, single buffered']
    %8 = vsyncpa [#allocation3], 0
    %9 = vsyncpa [#allocation6], 0
    %10 = vsyncpa [#allocation4], 0
    // Predicated region
    $region2: #{_actor_forward.1} parent=1 // pred_check
      _
    $region3: #{_actor_forward.1} parent=1 // pred_check_branch
      %12 = sbr.rel (0) target = $region5
    $region4: #{_actor_forward.1} parent=1 // pred_region
      %s14 = ssub.s32 128, 128
      %15 = vsyncadd [#allocation3], %s14
      %s17 = sshll.u32 [#allocation2], 4
      %s18 = int_to_ptr.vmem [resolvable:$true] %s17
      %20 = dma.hbm_to_vmem [thread:$0]  %s0, 128, %s18, [#allocation3]
    $region5: #{_actor_forward.1} parent=1 // pred_fallthru
      _
    // Predicated region
    $region6: #{_actor_forward.1} parent=1 // pred_check
      _
    $region7: #{_actor_forward.1} parent=1 // pred_check_branch
      %22 = sbr.rel (0) target = $region9
    $region8: #{_actor_forward.1} parent=1 // pred_region
      %s24 = ssub.s32 2048, 2048
      %25 = vsyncadd [#allocation6], %s24
      %s26 = sshll.u32 [#allocation5], 4
      %s27 = int_to_ptr.vmem [resolvable:$true] %s26
      %32 = dma.hbm_to_vmem [thread:$0]  %s1, 2048, %s27, [#allocation6], 64, 64, 4
    $region9: #{_actor_forward.1} parent=1 // pred_fallthru
      _
    // Predicated region
    $region10: #{_actor_forward.1} parent=1 // pred_check
      _
    $region11: #{_actor_forward.1} parent=1 // pred_check_branch
      %34 = sbr.rel (0) target = $region13
    $region12: #{_actor_forward.1} parent=1 // pred_region
      %s36 = ssub.s32 64, 64
      %37 = vsyncadd [#allocation6], %s36
      %s39 = sshll.u32 [#allocation7], 4
      %s40 = int_to_ptr.vmem [resolvable:$true] %s39
      %42 = dma.hbm_to_vmem [thread:$0]  %s2, 64, %s40, [#allocation6]
    $region13: #{_actor_forward.1} parent=1 // pred_fallthru
      _
    // Predicated region
    $region14: #{_actor_forward.1} parent=1 // pred_check
      _
    $region15: #{_actor_forward.1} parent=1 // pred_check_branch
      %44 = sbr.rel (0) target = $region17
    $region16: #{_actor_forward.1} parent=1 // pred_region
      %45 = dma.done [#allocation3], 128
    $region17: #{_actor_forward.1} parent=1 // pred_fallthru
      _
    // Predicated region
    $region18: #{_actor_forward.1} parent=1 // pred_check
      _
    $region19: #{_actor_forward.1} parent=1 // pred_check_branch
      %47 = sbr.rel (0) target = $region21
    $region20: #{_actor_forward.1} parent=1 // pred_region
      %48 = dma.done [#allocation6], 2048
    $region21: #{_actor_forward.1} parent=1 // pred_fallthru
      _
    // Predicated region
    $region22: #{_actor_forward.1} parent=1 // pred_check
      _
    $region23: #{_actor_forward.1} parent=1 // pred_check_branch
      %50 = sbr.rel (0) target = $region25
    $region24: #{_actor_forward.1} parent=1 // pred_region
      %51 = dma.done [#allocation6], 64
    $region25: #{_actor_forward.1} parent=1 // pred_fallthru
      _
    %v53 = vld [vmem:[#allocation2] sm:$0xff]
    %v54 = vpack.c.bf16 %v53, %v53
    %v55 = vld [vmem:[#allocation5] sm:$0xf]
    %v56 = vld [vmem:[#allocation5 + $0x4] sm:$0xf]
    %v57 = vld [vmem:[#allocation7] sm:$0x1]
    %v58 = vlaneseq
    %v59 = vshrl.u32 %v58, 7
    %v60 = vsub.s32 0, %v59
    %v61 = vrot.slane %v57, %v60
    %v64 = vunpack.c.l.b16 %v55
    %v65 = vunpack.c.l.b16 %v56
    %v66 = vpack.c.b16 %v65, %v64
    %vm68 = vcmask 130048
    %v70 = vsel %vm68, %v54, 0
    %72 = vmatprep.subr.bf16.mxu0 0
    %73 = vmatpush1.bf16.msra.mxu0 0
    %74 = vmatprep.subr.bf16.mxu0 0
    %75 = vmatpush1.bf16.msra.mxu0 0
    %76 = vmatprep.subr.bf16.mxu0 0
    %77 = vmatpush1.bf16.msra.mxu0 0
    %78 = vmatprep.subr.bf16.mxu0 0
    %79 = vmatpush1.bf16.msra.mxu0 0
    %80 = vmatprep.subr.bf16.mxu0 0
    %81 = vmatpush1.bf16.msra.mxu0 0
    %82 = vmatprep.subr.bf16.mxu0 0
    %83 = vmatpush1.bf16.msra.mxu0 0
    %84 = vmatprep.subr.bf16.mxu0 0
    %85 = vmatpush1.bf16.msra.mxu0 0
    %86 = vmatprep.subr.bf16.mxu0 0
    %87 = vmatpush1.bf16.msra.mxu0 %v66
    %88 = vmatprep.subr.bf16.mxu0 0
    %89 = vmatpush2.bf16.msra.mxu0 0
    %90 = vmatprep.subr.bf16.mxu0 0
    %91 = vmatpush2.bf16.msra.mxu0 0
    %92 = vmatprep.subr.bf16.mxu0 0
    %93 = vmatpush2.bf16.msra.mxu0 0
    %94 = vmatprep.subr.bf16.mxu0 0
    %95 = vmatpush2.bf16.msra.mxu0 0
    %96 = vmatprep.subr.bf16.mxu0 0
    %97 = vmatpush2.bf16.msra.mxu0 0
    %98 = vmatprep.subr.bf16.mxu0 0
    %99 = vmatpush2.bf16.msra.mxu0 0
    %100 = vmatprep.subr.bf16.mxu0 0
    %101 = vmatpush2.bf16.msra.mxu0 0
    %102 = vmatprep.subr.bf16.mxu0 0
    %103 = vmatpush2.bf16.msra.mxu0 0
    %104 = vmatprep.mubr.bf16.mxu0 0
    %105 = vmatmul.mubr.bf16.gmra.mxu0 %v70
    %v106 = vpop.f32.mrf.mxu0
    %v107 = vadd.f32 %v61, %v106
    %v108 = vpop.f32.mrf.mxu0
    %v109 = vpop.f32.mrf.mxu0
    %v110 = vpop.f32.mrf.mxu0
    %111 = vdwg.mxu0
    %v112 = vmax.f32 %v107, 0.0
    %v113 = vpack.c.bf16 %v112, %v112
    %s114 = scalar_lea.vmem [#allocation5], 32
    %v115 = vld [vmem:[%s114] sm:$0xf]
    %v116 = vld [vmem:[%s114 + $0x4] sm:$0xf]
    %v117 = vld [vmem:[%s114 + $0x8] sm:$0xf]
    %v118 = vld [vmem:[%s114 + $0xc] sm:$0xf]
    %v119 = vld [vmem:[%s114 + $0x10] sm:$0xf]
    %v120 = vld [vmem:[%s114 + $0x14] sm:$0xf]
    %v121 = vld [vmem:[%s114 + $0x18] sm:$0xf]
    %v122 = vld [vmem:[%s114 + $0x1c] sm:$0xf]
    %v123 = vld [vmem:[#allocation7 + $0x1] sm:$0x1]
    %v124 = vlaneseq
    %v125 = vshrl.u32 %v124, 7
    %v126 = vsub.s32 0, %v125
    %v127 = vrot.slane %v123, %v126
    %v136 = vunpack.c.l.b16 %v115
    %v137 = vunpack.c.l.b16 %v116
    %v138 = vunpack.c.l.b16 %v117
    %v139 = vunpack.c.l.b16 %v118
    %v140 = vunpack.c.l.b16 %v119
    %v141 = vunpack.c.l.b16 %v120
    %v142 = vunpack.c.l.b16 %v121
    %v143 = vunpack.c.l.b16 %v122
    %v144 = vpack.c.b16 %v137, %v136
    %v145 = vpack.c.b16 %v139, %v138
    %v146 = vpack.c.b16 %v141, %v140
    %v147 = vpack.c.b16 %v143, %v142
    %vm152 = vcmask 523264
    %v154 = vsel %vm152, %v113, 0
    %156 = vmatprep.subr.bf16.mxu0 0
    %157 = vmatpush1.bf16.msra.mxu0 0
    %158 = vmatprep.subr.bf16.mxu0 0
    %159 = vmatpush1.bf16.msra.mxu0 0
    %160 = vmatprep.subr.bf16.mxu0 0
    %161 = vmatpush1.bf16.msra.mxu0 0
    %162 = vmatprep.subr.bf16.mxu0 0
    %163 = vmatpush1.bf16.msra.mxu0 0
    %164 = vmatprep.subr.bf16.mxu0 0
    %165 = vmatpush1.bf16.msra.mxu0 %v147
    %166 = vmatprep.subr.bf16.mxu0 0
    %167 = vmatpush1.bf16.msra.mxu0 %v146
    %168 = vmatprep.subr.bf16.mxu0 0
    %169 = vmatpush1.bf16.msra.mxu0 %v145
    %170 = vmatprep.subr.bf16.mxu0 0
    %171 = vmatpush1.bf16.msra.mxu0 %v144
    %172 = vmatprep.subr.bf16.mxu0 0
    %173 = vmatpush2.bf16.msra.mxu0 0
    %174 = vmatprep.subr.bf16.mxu0 0
    %175 = vmatpush2.bf16.msra.mxu0 0
    %176 = vmatprep.subr.bf16.mxu0 0
    %177 = vmatpush2.bf16.msra.mxu0 0
    %178 = vmatprep.subr.bf16.mxu0 0
    %179 = vmatpush2.bf16.msra.mxu0 0
    %180 = vmatprep.subr.bf16.mxu0 0
    %181 = vmatpush2.bf16.msra.mxu0 0
    %182 = vmatprep.subr.bf16.mxu0 0
    %183 = vmatpush2.bf16.msra.mxu0 0
    %184 = vmatprep.subr.bf16.mxu0 0
    %185 = vmatpush2.bf16.msra.mxu0 0
    %186 = vmatprep.subr.bf16.mxu0 0
    %187 = vmatpush2.bf16.msra.mxu0 0
    %188 = vmatprep.mubr.bf16.mxu0 0
    %189 = vmatmul.mubr.bf16.gmra.mxu0 %v154
    %v190 = vpop.f32.mrf.mxu0
    %v191 = vadd.f32 %v127, %v190
    %v192 = vpop.f32.mrf.mxu0
    %v193 = vpop.f32.mrf.mxu0
    %v194 = vpop.f32.mrf.mxu0
    %195 = vdwg.mxu0
    %v196 = vmax.f32 %v191, 0.0
    %v197 = vpack.c.bf16 %v196, %v196
    %s198 = scalar_lea.vmem [#allocation5], 64
    %v199 = vld [vmem:[%s198] sm:$0xf]
    %v200 = vld [vmem:[%s198 + $0x4] sm:$0xf]
    %v201 = vld [vmem:[%s198 + $0x8] sm:$0xf]
    %v202 = vld [vmem:[%s198 + $0xc] sm:$0xf]
    %v203 = vld [vmem:[%s198 + $0x10] sm:$0xf]
    %v204 = vld [vmem:[%s198 + $0x14] sm:$0xf]
    %v205 = vld [vmem:[%s198 + $0x18] sm:$0xf]
    %v206 = vld [vmem:[%s198 + $0x1c] sm:$0xf]
    %v207 = vld [vmem:[#allocation7 + $0x2] sm:$0x1]
    %v208 = vlaneseq
    %v209 = vshrl.u32 %v208, 7
    %v210 = vsub.s32 0, %v209
    %v211 = vrot.slane %v207, %v210
    %v220 = vunpack.c.l.b16 %v199
    %v221 = vunpack.c.l.b16 %v200
    %v222 = vunpack.c.l.b16 %v201
    %v223 = vunpack.c.l.b16 %v202
    %v224 = vunpack.c.l.b16 %v203
    %v225 = vunpack.c.l.b16 %v204
    %v226 = vunpack.c.l.b16 %v205
    %v227 = vunpack.c.l.b16 %v206
    %v228 = vpack.c.b16 %v221, %v220
    %v229 = vpack.c.b16 %v223, %v222
    %v230 = vpack.c.b16 %v225, %v224
    %v231 = vpack.c.b16 %v227, %v226
    %v237 = vsel %vm152, %v197, 0
    %239 = vmatprep.subr.bf16.mxu0 0
    %240 = vmatpush1.bf16.msra.mxu0 0
    %241 = vmatprep.subr.bf16.mxu0 0
    %242 = vmatpush1.bf16.msra.mxu0 0
    %243 = vmatprep.subr.bf16.mxu0 0
    %244 = vmatpush1.bf16.msra.mxu0 0
    %245 = vmatprep.subr.bf16.mxu0 0
    %246 = vmatpush1.bf16.msra.mxu0 0
    %247 = vmatprep.subr.bf16.mxu0 0
    %248 = vmatpush1.bf16.msra.mxu0 %v231
    %249 = vmatprep.subr.bf16.mxu0 0
    %250 = vmatpush1.bf16.msra.mxu0 %v230
    %251 = vmatprep.subr.bf16.mxu0 0
    %252 = vmatpush1.bf16.msra.mxu0 %v229
    %253 = vmatprep.subr.bf16.mxu0 0
    %254 = vmatpush1.bf16.msra.mxu0 %v228
    %255 = vmatprep.subr.bf16.mxu0 0
    %256 = vmatpush2.bf16.msra.mxu0 0
    %257 = vmatprep.subr.bf16.mxu0 0
    %258 = vmatpush2.bf16.msra.mxu0 0
    %259 = vmatprep.subr.bf16.mxu0 0
    %260 = vmatpush2.bf16.msra.mxu0 0
    %261 = vmatprep.subr.bf16.mxu0 0
    %262 = vmatpush2.bf16.msra.mxu0 0
    %263 = vmatprep.subr.bf16.mxu0 0
    %264 = vmatpush2.bf16.msra.mxu0 0
    %265 = vmatprep.subr.bf16.mxu0 0
    %266 = vmatpush2.bf16.msra.mxu0 0
    %267 = vmatprep.subr.bf16.mxu0 0
    %268 = vmatpush2.bf16.msra.mxu0 0
    %269 = vmatprep.subr.bf16.mxu0 0
    %270 = vmatpush2.bf16.msra.mxu0 0
    %271 = vmatprep.mubr.bf16.mxu0 0
    %272 = vmatmul.mubr.bf16.gmra.mxu0 %v237
    %v273 = vpop.f32.mrf.mxu0
    %v274 = vadd.f32 %v211, %v273
    %v275 = vpop.f32.mrf.mxu0
    %v276 = vpop.f32.mrf.mxu0
    %v277 = vpop.f32.mrf.mxu0
    %278 = vdwg.mxu0
    %v279 = vmax.f32 %v274, 0.0
    %v280 = vpack.c.bf16 %v279, %v279
    %s281 = scalar_lea.vmem [#allocation5], 96
    %v282 = vld [vmem:[%s281] sm:$0xf]
    %v283 = vld [vmem:[%s281 + $0x4] sm:$0xf]
    %v284 = vld [vmem:[%s281 + $0x8] sm:$0xf]
    %v285 = vld [vmem:[%s281 + $0xc] sm:$0xf]
    %v286 = vld [vmem:[#allocation7 + $0x3] sm:$0x1]
    %v287 = vlaneseq
    %v288 = vshrl.u32 %v287, 7
    %v289 = vsub.s32 0, %v288
    %v290 = vrot.slane %v286, %v289
    %v295 = vunpack.c.l.b16 %v282
    %v296 = vunpack.c.l.b16 %v283
    %v297 = vunpack.c.l.b16 %v284
    %v298 = vunpack.c.l.b16 %v285
    %v299 = vpack.c.b16 %v296, %v295
    %v300 = vpack.c.b16 %v298, %v297
    %vm303 = vcmask 261120
    %v305 = vsel %vm303, %v280, 0
    %307 = vmatprep.subr.bf16.mxu0 0
    %308 = vmatpush1.bf16.msra.mxu0 0
    %309 = vmatprep.subr.bf16.mxu0 0
    %310 = vmatpush1.bf16.msra.mxu0 0
    %311 = vmatprep.subr.bf16.mxu0 0
    %312 = vmatpush1.bf16.msra.mxu0 0
    %313 = vmatprep.subr.bf16.mxu0 0
    %314 = vmatpush1.bf16.msra.mxu0 0
    %315 = vmatprep.subr.bf16.mxu0 0
    %316 = vmatpush1.bf16.msra.mxu0 0
    %317 = vmatprep.subr.bf16.mxu0 0
    %318 = vmatpush1.bf16.msra.mxu0 0
    %319 = vmatprep.subr.bf16.mxu0 0
    %320 = vmatpush1.bf16.msra.mxu0 %v300
    %321 = vmatprep.subr.bf16.mxu0 0
    %322 = vmatpush1.bf16.msra.mxu0 %v299
    %323 = vmatprep.subr.bf16.mxu0 0
    %324 = vmatpush2.bf16.msra.mxu0 0
    %325 = vmatprep.subr.bf16.mxu0 0
    %326 = vmatpush2.bf16.msra.mxu0 0
    %327 = vmatprep.subr.bf16.mxu0 0
    %328 = vmatpush2.bf16.msra.mxu0 0
    %329 = vmatprep.subr.bf16.mxu0 0
    %330 = vmatpush2.bf16.msra.mxu0 0
    %331 = vmatprep.subr.bf16.mxu0 0
    %332 = vmatpush2.bf16.msra.mxu0 0
    %333 = vmatprep.subr.bf16.mxu0 0
    %334 = vmatpush2.bf16.msra.mxu0 0
    %335 = vmatprep.subr.bf16.mxu0 0
    %336 = vmatpush2.bf16.msra.mxu0 0
    %337 = vmatprep.subr.bf16.mxu0 0
    %338 = vmatpush2.bf16.msra.mxu0 0
    %339 = vmatprep.mubr.bf16.mxu0 0
    %340 = vmatmul.mubr.bf16.gmra.mxu0 %v305
    %v341 = vpop.f32.mrf.mxu0
    %v342 = vadd.f32 %v290, %v341
    %v343 = vpop.f32.mrf.mxu0
    %v344 = vpop.f32.mrf.mxu0
    %v345 = vpop.f32.mrf.mxu0
    %346 = vdwg.mxu0
    %vm347 = vcmask 64512
    %v348 = vsel %vm347, %v342, -inf
    %349 = vmax.xlane.f32.xlu0 %v348
    %v350 = vpop.xlane.xlu0 %349
    %v351 = vsub.f32 %v342, %v350
    %v352 = vmul.f32 %v351, 1.442695
    %v353 = vpow.pop %v352
    %v354 = vsel %vm347, %v353, 0.0
    %355 = vadd.xlane.f32.xlu0 %v354
    %v356 = vpop.xlane.xlu0 %355
    %v357 = vrcp.pop %v356
    %v358 = vmul.f32 %v353, %v357
    %v359 = vsel %vm347, %v358, 0.0
    %360 = vst [vmem:[#allocation8] sm:$0xff] %v359
    // Predicated region
    $region26: #{_actor_forward.1} parent=1 // pred_check
      _
    $region27: #{_actor_forward.1} parent=1 // pred_check_branch
      %362 = sbr.rel (0) target = $region29
    $region28: #{_actor_forward.1} parent=1 // pred_region
      %s364 = ssub.s32 128, 128
      %365 = vsyncadd [#allocation4], %s364
      %s367 = sshll.u32 [#allocation8], 4
      %s368 = int_to_ptr.vmem [resolvable:$true] %s367
      %370 = dma.vmem_to_hbm [thread:$0]  %s368, 128, %s3, [#allocation4]
    $region29: #{_actor_forward.1} parent=1 // pred_fallthru
      _
    // Predicated region
    $region30: #{_actor_forward.1} parent=1 // pred_check
      _
    $region31: #{_actor_forward.1} parent=1 // pred_check_branch
      %372 = sbr.rel (0) target = $region33
    $region32: #{_actor_forward.1} parent=1 // pred_region
      %373 = dma.done [#allocation4], 128
    $region33: #{_actor_forward.1} parent=1 // pred_fallthru
      _
    %374 = vsyncpa [#allocation3], 1
    %375 = vsyncpa [#allocation6], 1
    %376 = vsyncpa [#allocation4], 1

</llo_original>
